<compile_context>
chip_gen: v7x
topology: tpu7x:2x2x1
jax: 0.10.0
libtpu: 0.0.40
codegen_flags: <defaults>
</compile_context>

<pallas_src>
import jax
import jax.numpy as jnp
from jax.experimental import pallas as pl
from jax.experimental.pallas import tpu as pltpu

_HIDDEN = 256
_OUT_PAD = 8  # narrow lane pad for fc3; real Q value lives in column 0


def _round_up(x, m):
    return ((x + m - 1) // m) * m


def _critic_kernel(s_ref, a_ref, w1s_ref, w1a_ref, b1_ref, w2_ref, b2_ref,
                   w3_ref, b3_ref, q_ref):
    cdt = w2_ref.dtype                                     # compute dtype (bf16)

    # fc1: split dot over the pre-split weight halves (fuses the torch.cat).
    s = s_ref[...].astype(cdt)                             # (TB, S)
    a = a_ref[...].astype(cdt)                             # (TB, A)
    h1 = (jnp.dot(s, w1s_ref[...], preferred_element_type=jnp.float32)
          + jnp.dot(a, w1a_ref[...], preferred_element_type=jnp.float32)
          + b1_ref[...])
    h1 = jnp.maximum(h1, 0.0)                              # f32 ReLU (VPU)

    # fc2 — dominates FLOPs; bf16 MXU inputs, f32 accumulation.
    h2 = (jnp.dot(h1.astype(cdt), w2_ref[...],
                  preferred_element_type=jnp.float32) + b2_ref[...])
    h2 = jnp.maximum(h2, 0.0)

    # fc3 padded only to 8 columns (extra columns have zero weight/bias).
    q = (jnp.dot(h2.astype(cdt), w3_ref[...],
                 preferred_element_type=jnp.float32) + b3_ref[...])
    q_ref[...] = q.astype(q_ref.dtype)                     # (TB, 8) f32


def prepare_params(params, state_dim, compute_dtype=jnp.bfloat16):
    """One-time conversion of (in, out)-layout params into kernel-ready form."""
    hidden = params["w2"].shape[0]
    n_out = params["w3"].shape[1]
    w3p = jnp.zeros((hidden, _OUT_PAD), params["w3"].dtype).at[:, :n_out].set(params["w3"])
    b3p = jnp.zeros((_OUT_PAD,), params["b3"].dtype).at[:n_out].set(params["b3"])
    return {
        "w1_s": params["w1"][:state_dim].astype(compute_dtype),
        "w1_a": params["w1"][state_dim:].astype(compute_dtype),
        "b1": params["b1"].reshape(1, -1).astype(jnp.float32),
        "w2": params["w2"].astype(compute_dtype),
        "b2": params["b2"].reshape(1, -1).astype(jnp.float32),
        "w3": w3p.astype(compute_dtype),
        "b3": b3p.reshape(1, -1).astype(jnp.float32),
    }


def _pick_tile(B, tb_max):
    """Batch tile: multiple of 8; >=2 grid steps for large batches (v7x dual-TC)."""
    b8 = _round_up(B, 8)
    if b8 <= 256:
        return min(tb_max, b8)                 # tiny RL batch: one small tile
    half = _round_up(-(-b8 // 2), 128)         # ceil(b8/2) rounded to 128 (MXU-friendly M)
    return min(tb_max, half)


def critic_forward(state, action, kparams, *, tb=2048):
    """Fused Pallas forward.  Returns (B, 1) f32 Q-values."""
    B, s_dim = state.shape
    a_dim = action.shape[1]
    hidden = kparams["w2"].shape[0]
    out_pad = kparams["w3"].shape[1]
    compute_dtype = kparams["w2"].dtype

    tb = max(8, (tb // 8) * 8)
    tb_eff = _pick_tile(B, tb)
    grid = (pl.cdiv(B, tb_eff),)

    itemsize = jnp.dtype(compute_dtype).itemsize
    in_itemsize = jnp.dtype(state.dtype).itemsize
    flops = 2 * B * ((s_dim + a_dim) * hidden + hidden * hidden + hidden * out_pad)
    param_bytes = ((s_dim + a_dim) * hidden + hidden * hidden + hidden * out_pad) * itemsize \
        + (2 * hidden + out_pad) * 4
    bytes_accessed = B * (s_dim + a_dim) * in_itemsize + B * out_pad * 4 + param_bytes

    q_pad = pl.pallas_call(
        _critic_kernel,
        out_shape=jax.ShapeDtypeStruct((B, out_pad), jnp.float32),
        grid=grid,
        in_specs=[
            pl.BlockSpec((tb_eff, s_dim), lambda i: (i, 0)),    # state tile (streamed)
            pl.BlockSpec((tb_eff, a_dim), lambda i: (i, 0)),    # action tile (streamed)
            pl.BlockSpec((s_dim, hidden), lambda i: (0, 0)),    # w1_s (resident)
            pl.BlockSpec((a_dim, hidden), lambda i: (0, 0)),    # w1_a
            pl.BlockSpec((1, hidden), lambda i: (0, 0)),        # b1
            pl.BlockSpec((hidden, hidden), lambda i: (0, 0)),   # w2
            pl.BlockSpec((1, hidden), lambda i: (0, 0)),        # b2
            pl.BlockSpec((hidden, out_pad), lambda i: (0, 0)),  # w3 (8-lane pad)
            pl.BlockSpec((1, out_pad), lambda i: (0, 0)),       # b3
        ],
        out_specs=pl.BlockSpec((tb_eff, out_pad), lambda i: (i, 0)),
        compiler_params=pltpu.CompilerParams(
            dimension_semantics=("parallel",)),
        cost_estimate=pl.CostEstimate(
            flops=flops, transcendentals=0, bytes_accessed=bytes_accessed),
    )(state, action, kparams["w1_s"], kparams["w1_a"], kparams["b1"],
      kparams["w2"], kparams["b2"], kparams["w3"], kparams["b3"])

    return q_pad[:, :1]                                    # (B, 1)


def init_params(key, state_dim, action_dim, hidden=_HIDDEN):
    """Mirror nn.Linear default init, weights stored (in_features, out_features)."""
    def linear(k, fan_in, fan_out):
        kw, kb = jax.random.split(k)
        bound = 1.0 / jnp.sqrt(jnp.float32(fan_in))
        w = jax.random.uniform(kw, (fan_in, fan_out), jnp.float32, -bound, bound)
        b = jax.random.uniform(kb, (fan_out,), jnp.float32, -bound, bound)
        return w, b

    k1, k2, k3 = jax.random.split(key, 3)
    w1, b1 = linear(k1, state_dim + action_dim, hidden)
    w2, b2 = linear(k2, hidden, hidden)
    w3, b3 = linear(k3, hidden, 1)
    return {"w1": w1, "b1": b1, "w2": w2, "b2": b2, "w3": w3, "b3": b3}


def _reference_forward_f32(state, action, params):
    x = jnp.concatenate([state, action], axis=1)
    h1 = jax.nn.relu(x @ params["w1"] + params["b1"])
    h2 = jax.nn.relu(h1 @ params["w2"] + params["b2"])
    return h2 @ params["w3"] + params["b3"]


def _reference_forward_bf16(state, action, params):
    # Same math path as the kernel (bf16 MXU inputs, f32 accumulation).
    bf = jnp.bfloat16
    x = jnp.concatenate([state, action], axis=1).astype(bf)
    h1 = jax.nn.relu(jnp.dot(x, params["w1"].astype(bf),
                             preferred_element_type=jnp.float32) + params["b1"])
    h2 = jax.nn.relu(jnp.dot(h1.astype(bf), params["w2"].astype(bf),
                             preferred_element_type=jnp.float32) + params["b2"])
    return jnp.dot(h2.astype(bf), params["w3"].astype(bf),
                   preferred_element_type=jnp.float32) + params["b3"]


if __name__ == "__main__":
    batch = 4
    state_dim = 16
    action_dim = 8

    key = jax.random.PRNGKey(0)
    kp, ks, ka = jax.random.split(key, 3)

    params = init_params(kp, state_dim, action_dim)
    kparams = prepare_params(params, state_dim)

    state = jax.random.normal(ks, (batch, state_dim), jnp.float32)
    action = jax.random.normal(ka, (batch, action_dim), jnp.float32)

    q = critic_forward(state, action, kparams)
    q = jax.block_until_ready(q)
    assert q.shape == (batch, 1)

    q_ref_bf16 = _reference_forward_bf16(state, action, params)
    q_ref_f32 = _reference_forward_f32(state, action, params)
    assert jnp.allclose(q, q_ref_bf16, atol=2e-3, rtol=2e-3), "mismatch vs. bf16-path reference"
    assert jnp.allclose(q, q_ref_f32, atol=5e-2, rtol=5e-2), "mismatch vs. f32 reference"

    # Exercise the multi-step grid + partial edge-block path with a batch that
    # does not divide the tile size.
    batch2 = 20
    ks2, ka2 = jax.random.split(jax.random.PRNGKey(1))
    state2 = jax.random.normal(ks2, (batch2, state_dim), jnp.float32)
    action2 = jax.random.normal(ka2, (batch2, action_dim), jnp.float32)
    q2 = jax.block_until_ready(critic_forward(state2, action2, kparams, tb=8))
    q2_ref = _reference_forward_bf16(state2, action2, params)
    assert q2.shape == (batch2, 1)
    assert jnp.allclose(q2, q2_ref, atol=2e-3, rtol=2e-3), "mismatch on tiled batch"

    print("KERNEL_OK")
</pallas_src>

<mosaic_0001>
module attributes {stable_mosaic.version = 11 : i64} {
  func.func @_critic_kernel(%arg0: i32, %arg1: memref<8x16xf32, #tpu.memory_space<vmem>>, %arg2: memref<8x8xf32, #tpu.memory_space<vmem>>, %arg3: memref<16x256xbf16, #tpu.memory_space<vmem>>, %arg4: memref<8x256xbf16, #tpu.memory_space<vmem>>, %arg5: memref<1x256xf32, #tpu.memory_space<vmem>>, %arg6: memref<256x256xbf16, #tpu.memory_space<vmem>>, %arg7: memref<1x256xf32, #tpu.memory_space<vmem>>, %arg8: memref<256x8xbf16, #tpu.memory_space<vmem>>, %arg9: memref<1x8xf32, #tpu.memory_space<vmem>>, %arg10: memref<8x8xf32, #tpu.memory_space<vmem>>) attributes {dimension_semantics = [#tpu.dimension_semantics<parallel>], iteration_bounds = array<i64: 1>, scalar_prefetch = 0 : i64, scratch_operands = 0 : i64, tpu.core_type = #tpu.core_type<tc>, window_params = [{transform_indices = @transform_0, window_bounds = array<i64: 8, 16>}, {transform_indices = @transform_1, window_bounds = array<i64: 8, 8>}, {pipeline_mode = #tpu.pipeline_mode<synchronous>, transform_indices = @transform_2, window_bounds = array<i64: 16, 256>}, {pipeline_mode = #tpu.pipeline_mode<synchronous>, transform_indices = @transform_3, window_bounds = array<i64: 8, 256>}, {pipeline_mode = #tpu.pipeline_mode<synchronous>, transform_indices = @transform_4, window_bounds = array<i64: 1, 256>}, {pipeline_mode = #tpu.pipeline_mode<synchronous>, transform_indices = @transform_5, window_bounds = array<i64: 256, 256>}, {pipeline_mode = #tpu.pipeline_mode<synchronous>, transform_indices = @transform_6, window_bounds = array<i64: 1, 256>}, {pipeline_mode = #tpu.pipeline_mode<synchronous>, transform_indices = @transform_7, window_bounds = array<i64: 256, 8>}, {pipeline_mode = #tpu.pipeline_mode<synchronous>, transform_indices = @transform_8, window_bounds = array<i64: 1, 8>}, {transform_indices = @transform_9, window_bounds = array<i64: 8, 8>}]} {
    %c0 = arith.constant 0 : index
    %c0_0 = arith.constant 0 : index
    %0 = vector.load %arg1[%c0, %c0_0] : memref<8x16xf32, #tpu.memory_space<vmem>>, vector<8x16xf32>
    %1 = arith.truncf %0 : vector<8x16xf32> to vector<8x16xbf16>
    %c0_1 = arith.constant 0 : index
    %c0_2 = arith.constant 0 : index
    %2 = vector.load %arg2[%c0_1, %c0_2] : memref<8x8xf32, #tpu.memory_space<vmem>>, vector<8x8xf32>
    %3 = arith.truncf %2 : vector<8x8xf32> to vector<8x8xbf16>
    %c0_3 = arith.constant 0 : index
    %c0_4 = arith.constant 0 : index
    %4 = vector.load %arg3[%c0_3, %c0_4] : memref<16x256xbf16, #tpu.memory_space<vmem>>, vector<16x256xbf16>
    %cst = arith.constant dense<0.000000e+00> : vector<8x256xf32>
    %5 = tpu.matmul %1, %4, %cst {dimension_numbers = #tpu.dot_dimension_numbers<[1], [0], [0], [1], [0, 0, 1, 1], [], []>} : vector<8x16xbf16>, vector<16x256xbf16>, vector<8x256xf32> -> vector<8x256xf32>
    %c0_5 = arith.constant 0 : index
    %c0_6 = arith.constant 0 : index
    %6 = vector.load %arg4[%c0_5, %c0_6] : memref<8x256xbf16, #tpu.memory_space<vmem>>, vector<8x256xbf16>
    %cst_7 = arith.constant dense<0.000000e+00> : vector<8x256xf32>
    %7 = tpu.matmul %3, %6, %cst_7 {dimension_numbers = #tpu.dot_dimension_numbers<[1], [0], [0], [1], [0, 0, 1, 1], [], []>} : vector<8x8xbf16>, vector<8x256xbf16>, vector<8x256xf32> -> vector<8x256xf32>
    %8 = arith.addf %5, %7 : vector<8x256xf32>
    %c0_8 = arith.constant 0 : index
    %c0_9 = arith.constant 0 : index
    %9 = vector.load %arg5[%c0_8, %c0_9] : memref<1x256xf32, #tpu.memory_space<vmem>>, vector<1x256xf32>
    %10 = vector.broadcast %9 : vector<1x256xf32> to vector<8x256xf32>
    %11 = arith.addf %8, %10 : vector<8x256xf32>
    %cst_10 = arith.constant 0.000000e+00 : f32
    %12 = vector.broadcast %cst_10 : f32 to vector<8x256xf32>
    %13 = arith.maximumf %11, %12 : vector<8x256xf32>
    %14 = arith.truncf %13 : vector<8x256xf32> to vector<8x256xbf16>
    %c0_11 = arith.constant 0 : index
    %c0_12 = arith.constant 0 : index
    %15 = vector.load %arg6[%c0_11, %c0_12] : memref<256x256xbf16, #tpu.memory_space<vmem>>, vector<256x256xbf16>
    %cst_13 = arith.constant dense<0.000000e+00> : vector<8x256xf32>
    %16 = tpu.matmul %14, %15, %cst_13 {dimension_numbers = #tpu.dot_dimension_numbers<[1], [0], [0], [1], [0, 0, 1, 1], [], []>} : vector<8x256xbf16>, vector<256x256xbf16>, vector<8x256xf32> -> vector<8x256xf32>
    %c0_14 = arith.constant 0 : index
    %c0_15 = arith.constant 0 : index
    %17 = vector.load %arg7[%c0_14, %c0_15] : memref<1x256xf32, #tpu.memory_space<vmem>>, vector<1x256xf32>
    %18 = vector.broadcast %17 : vector<1x256xf32> to vector<8x256xf32>
    %19 = arith.addf %16, %18 : vector<8x256xf32>
    %cst_16 = arith.constant 0.000000e+00 : f32
    %20 = vector.broadcast %cst_16 : f32 to vector<8x256xf32>
    %21 = arith.maximumf %19, %20 : vector<8x256xf32>
    %22 = arith.truncf %21 : vector<8x256xf32> to vector<8x256xbf16>
    %c0_17 = arith.constant 0 : index
    %c0_18 = arith.constant 0 : index
    %23 = vector.load %arg8[%c0_17, %c0_18] : memref<256x8xbf16, #tpu.memory_space<vmem>>, vector<256x8xbf16>
    %cst_19 = arith.constant dense<0.000000e+00> : vector<8x8xf32>
    %24 = tpu.matmul %22, %23, %cst_19 {dimension_numbers = #tpu.dot_dimension_numbers<[1], [0], [0], [1], [0, 0, 1, 1], [], []>} : vector<8x256xbf16>, vector<256x8xbf16>, vector<8x8xf32> -> vector<8x8xf32>
    %c0_20 = arith.constant 0 : index
    %c0_21 = arith.constant 0 : index
    %25 = vector.load %arg9[%c0_20, %c0_21] : memref<1x8xf32, #tpu.memory_space<vmem>>, vector<1x8xf32>
    %26 = vector.broadcast %25 : vector<1x8xf32> to vector<8x8xf32>
    %27 = arith.addf %24, %26 : vector<8x8xf32>
    %c0_22 = arith.constant 0 : index
    %c0_23 = arith.constant 0 : index
    %28 = vector.load %arg10[%c0_22, %c0_23] : memref<8x8xf32, #tpu.memory_space<vmem>>, vector<8x8xf32>
    tpu.vector_store %arg10[%c0_22, %c0_23], %27 {strides = array<i32>} : memref<8x8xf32, #tpu.memory_space<vmem>>, vector<8x8xf32>,
    return
  }
  func.func @transform_0(%arg0: i32) -> (i32, i32) {
    %c0_i32 = arith.constant 0 : i32
    %c0_i32_0 = arith.constant 0 : i32
    return %arg0, %c0_i32 : i32, i32
  }
  func.func @transform_1(%arg0: i32) -> (i32, i32) {
    %c0_i32 = arith.constant 0 : i32
    %c0_i32_0 = arith.constant 0 : i32
    return %arg0, %c0_i32 : i32, i32
  }
  func.func @transform_2(%arg0: i32) -> (i32, i32) {
    %c0_i32 = arith.constant 0 : i32
    %c0_i32_0 = arith.constant 0 : i32
    %c0_i32_1 = arith.constant 0 : i32
    return %c0_i32, %c0_i32_0 : i32, i32
  }
  func.func @transform_3(%arg0: i32) -> (i32, i32) {
    %c0_i32 = arith.constant 0 : i32
    %c0_i32_0 = arith.constant 0 : i32
    %c0_i32_1 = arith.constant 0 : i32
    return %c0_i32, %c0_i32_0 : i32, i32
  }
  func.func @transform_4(%arg0: i32) -> (i32, i32) {
    %c0_i32 = arith.constant 0 : i32
    %c0_i32_0 = arith.constant 0 : i32
    %c0_i32_1 = arith.constant 0 : i32
    return %c0_i32, %c0_i32_0 : i32, i32
  }
  func.func @transform_5(%arg0: i32) -> (i32, i32) {
    %c0_i32 = arith.constant 0 : i32
    %c0_i32_0 = arith.constant 0 : i32
    %c0_i32_1 = arith.constant 0 : i32
    return %c0_i32, %c0_i32_0 : i32, i32
  }
  func.func @transform_6(%arg0: i32) -> (i32, i32) {
    %c0_i32 = arith.constant 0 : i32
    %c0_i32_0 = arith.constant 0 : i32
    %c0_i32_1 = arith.constant 0 : i32
    return %c0_i32, %c0_i32_0 : i32, i32
  }
  func.func @transform_7(%arg0: i32) -> (i32, i32) {
    %c0_i32 = arith.constant 0 : i32
    %c0_i32_0 = arith.constant 0 : i32
    %c0_i32_1 = arith.constant 0 : i32
    return %c0_i32, %c0_i32_0 : i32, i32
  }
  func.func @transform_8(%arg0: i32) -> (i32, i32) {
    %c0_i32 = arith.constant 0 : i32
    %c0_i32_0 = arith.constant 0 : i32
    %c0_i32_1 = arith.constant 0 : i32
    return %c0_i32, %c0_i32_0 : i32, i32
  }
  func.func @transform_9(%arg0: i32) -> (i32, i32) {
    %c0_i32 = arith.constant 0 : i32
    %c0_i32_0 = arith.constant 0 : i32
    return %arg0, %c0_i32 : i32, i32
  }
}

</mosaic_0001>

<llo_original>
// kernel: tpu_custom_call.1
$region0: #{tpu_custom_call.1}
  #allocation0 [shape = 'u32[]', space=smem, size = 0x4, offset = 0x4, fixed_abs, tag = 'smem constant byte address 0x4 - core index']
  #allocation1 [shape = 'u32[144,128]{1,0:T(1,128)}', space=vmem, size = 0x12000, scoped, tag = 'internal scratch']
  %s0 = inlined_call_operand.vmem [shape: f32[4,16], index: 0, kind: input, shape index: {}]
  %s1 = inlined_call_operand.vmem [shape: f32[4,8], index: 1, kind: input, shape index: {}]
  %s2 = inlined_call_operand.vmem [shape: bf16[16,256], index: 2, kind: input, shape index: {}]
  %s3 = inlined_call_operand.vmem [shape: bf16[8,256], index: 3, kind: input, shape index: {}]
  %s4 = inlined_call_operand.vmem [shape: f32[1,256], index: 4, kind: input, shape index: {}]
  %s5 = inlined_call_operand.hbm [shape: bf16[256,256], index: 5, kind: input, shape index: {}]
  %s6 = inlined_call_operand.vmem [shape: f32[1,256], index: 6, kind: input, shape index: {}]
  %s7 = inlined_call_operand.vmem [shape: bf16[256,8], index: 7, kind: input, shape index: {}]
  %s8 = inlined_call_operand.vmem [shape: f32[1,8], index: 8, kind: input, shape index: {}]
  %s9 = inlined_call_operand.hbm [shape: f32[4,8], index: 9, kind: output, shape index: {}]
  %s10 = sld [smem:[#allocation0]]
  $region50: #{tpu_custom_call.1} parent=0
    _
  %s12 = ssub.s32 1, %s10
  %s13 = scalar_select 0, %s12, %s10
  $region1: #{tpu_custom_call.1} parent=0
    #allocation2 [shape = 'u8[131072]{0}', space=vmem, size = 0x20000, scoped, tag = 'input window, operand 5, single buffered']
    #allocation3 [shape = 's32[1]{0}', space=sflag, size = 0x4, scoped, tag = 'scoped memory for tpu_custom_call.1']
    #allocation4 [shape = 's32[1]{0}', space=sflag, size = 0x4, scoped, tag = 'scoped memory for tpu_custom_call.1']
    #allocation5 [shape = 'u8[4096]{0}', space=vmem, size = 0x1000, scoped, tag = 'output window, operand 0, single buffered']
    %14 = vsyncpa [#allocation3], 0
    %15 = vsyncpa [#allocation4], 0
    // Predicated region
    $region2: #{tpu_custom_call.1} parent=1 // pred_check
      _
    $region3: #{tpu_custom_call.1} parent=1 // pred_check_branch
      %17 = sbr.rel (0) target = $region5
    $region4: #{tpu_custom_call.1} parent=1 // pred_region
      _
    $region5: #{tpu_custom_call.1} parent=1 // pred_fallthru
      _
    // Predicated region
    $region6: #{tpu_custom_call.1} parent=1 // pred_check
      _
    $region7: #{tpu_custom_call.1} parent=1 // pred_check_branch
      %19 = sbr.rel (0) target = $region9
    $region8: #{tpu_custom_call.1} parent=1 // pred_region
      _
    $region9: #{tpu_custom_call.1} parent=1 // pred_fallthru
      _
    // Predicated region
    $region10: #{tpu_custom_call.1} parent=1 // pred_check
      _
    $region11: #{tpu_custom_call.1} parent=1 // pred_check_branch
      %21 = sbr.rel (0) target = $region13
    $region12: #{tpu_custom_call.1} parent=1 // pred_region
      _
    $region13: #{tpu_custom_call.1} parent=1 // pred_fallthru
      _
    // Predicated region
    $region14: #{tpu_custom_call.1} parent=1 // pred_check
      _
    $region15: #{tpu_custom_call.1} parent=1 // pred_check_branch
      %23 = sbr.rel (0) target = $region17
    $region16: #{tpu_custom_call.1} parent=1 // pred_region
      _
    $region17: #{tpu_custom_call.1} parent=1 // pred_fallthru
      _
    // Predicated region
    $region18: #{tpu_custom_call.1} parent=1 // pred_check
      _
    $region19: #{tpu_custom_call.1} parent=1 // pred_check_branch
      %25 = sbr.rel (0) target = $region21
    $region20: #{tpu_custom_call.1} parent=1 // pred_region
      _
    $region21: #{tpu_custom_call.1} parent=1 // pred_fallthru
      _
    // Predicated region
    $region22: #{tpu_custom_call.1} parent=1 // pred_check
      _
    $region23: #{tpu_custom_call.1} parent=1 // pred_check_branch
      %27 = sbr.rel (0) target = $region25
    $region24: #{tpu_custom_call.1} parent=1 // pred_region
      %s29 = ssub.s32 4096, 4096
      %30 = vsyncadd [#allocation3], %s29
      %s31 = sshll.u32 [#allocation2], 4
      %s32 = int_to_ptr.vmem [resolvable:$true] %s31
      %37 = dma.hbm_to_vmem [thread:$0]  %s5, 4096, %s32, [#allocation3], 128, 128, 8
    $region25: #{tpu_custom_call.1} parent=1 // pred_fallthru
      _
    // Predicated region
    $region26: #{tpu_custom_call.1} parent=1 // pred_check
      _
    $region27: #{tpu_custom_call.1} parent=1 // pred_check_branch
      %39 = sbr.rel (0) target = $region29
    $region28: #{tpu_custom_call.1} parent=1 // pred_region
      _
    $region29: #{tpu_custom_call.1} parent=1 // pred_fallthru
      _
    // Predicated region
    $region30: #{tpu_custom_call.1} parent=1 // pred_check
      _
    $region31: #{tpu_custom_call.1} parent=1 // pred_check_branch
      %41 = sbr.rel (0) target = $region33
    $region32: #{tpu_custom_call.1} parent=1 // pred_region
      _
    $region33: #{tpu_custom_call.1} parent=1 // pred_fallthru
      _
    // Predicated region
    $region34: #{tpu_custom_call.1} parent=1 // pred_check
      _
    $region35: #{tpu_custom_call.1} parent=1 // pred_check_branch
      %43 = sbr.rel (0) target = $region37
    $region36: #{tpu_custom_call.1} parent=1 // pred_region
      _
    $region37: #{tpu_custom_call.1} parent=1 // pred_fallthru
      _
    // Predicated region
    $region38: #{tpu_custom_call.1} parent=1 // pred_check
      _
    $region39: #{tpu_custom_call.1} parent=1 // pred_check_branch
      %45 = sbr.rel (0) target = $region41
    $region40: #{tpu_custom_call.1} parent=1 // pred_region
      %46 = dma.done [#allocation3], 4096
    $region41: #{tpu_custom_call.1} parent=1 // pred_fallthru
      _
    %v48 = vld [vmem:[%s0] sm:$0xff]
    %v49 = vpack.c.bf16 %v48, %v48
    %v50 = vld [vmem:[%s1] sm:$0xff]
    %v51 = vpack.c.bf16 %v50, %v50
    %v52 = vld [vmem:[%s2] sm:$0xff]
    %v53 = vld [vmem:[%s2 + $0x8] sm:$0xff]
    %v54 = vld [vmem:[%s3] sm:$0xff]
    %v56 = vunpack.c.l.b16 %v54
    %v57 = vunpack.c.h.b16 %v54
    %v58 = vpack.c.b16 %v56, %v56
    %v59 = vpack.c.b16 %v57, %v57
    %vm60 = vcmask 64512
    %v62 = vsel %vm60, %v51, 0
    %vm64 = vcmask 1043456
    %v66 = vsel %vm64, %v58, 0
    %v69 = vsel %vm64, %v59, 0
    %71 = vmatprep.subr.bf16.mxu0 %v69
    %72 = vmatpush1.bf16.msra.mxu0 %v66
    %73 = vmatprep.subr.bf16.mxu0 0
    %74 = vmatpush1.bf16.msra.mxu0 0
    %75 = vmatprep.subr.bf16.mxu0 0
    %76 = vmatpush1.bf16.msra.mxu0 0
    %77 = vmatprep.subr.bf16.mxu0 0
    %78 = vmatpush1.bf16.msra.mxu0 0
    %79 = vmatprep.subr.bf16.mxu0 0
    %80 = vmatpush1.bf16.msra.mxu0 0
    %81 = vmatprep.subr.bf16.mxu0 0
    %82 = vmatpush1.bf16.msra.mxu0 0
    %83 = vmatprep.subr.bf16.mxu0 0
    %84 = vmatpush1.bf16.msra.mxu0 0
    %85 = vmatprep.subr.bf16.mxu0 0
    %86 = vmatpush1.bf16.msra.mxu0 0
    %87 = vmatprep.subr.bf16.mxu0 0
    %88 = vmatpush1.bf16.msra.mxu0 0
    %89 = vmatprep.subr.bf16.mxu0 0
    %90 = vmatpush1.bf16.msra.mxu0 0
    %91 = vmatprep.subr.bf16.mxu0 0
    %92 = vmatpush1.bf16.msra.mxu0 0
    %93 = vmatprep.subr.bf16.mxu0 0
    %94 = vmatpush1.bf16.msra.mxu0 0
    %95 = vmatprep.subr.bf16.mxu0 0
    %96 = vmatpush1.bf16.msra.mxu0 0
    %97 = vmatprep.subr.bf16.mxu0 0
    %98 = vmatpush1.bf16.msra.mxu0 0
    %99 = vmatprep.subr.bf16.mxu0 0
    %100 = vmatpush1.bf16.msra.mxu0 0
    %101 = vmatprep.subr.bf16.mxu0 0
    %102 = vmatpush1.bf16.msra.mxu0 0
    %103 = vmatprep.mubr.bf16.mxu0 0
    %104 = vmatmul.mubr.bf16.gmra.mrb[0].mxu0 %v62
    %v105 = vpop.f32.mrb[0].mxu0
    %v106 = vadd.f32 0.0, %v105
    %v107 = vpop.f32.mrb[0].mxu0
    %v108 = vadd.f32 0.0, %v107
    %v109 = vpop.f32.mrb[0].mxu0
    %v110 = vpop.f32.mrb[0].mxu0
    %111 = vdwg.mxu0
    %v114 = vunpack.c.l.b16 %v52
    %v115 = vunpack.c.h.b16 %v52
    %v116 = vunpack.c.l.b16 %v53
    %v117 = vunpack.c.h.b16 %v53
    %v118 = vpack.c.b16 %v116, %v114
    %v119 = vpack.c.b16 %v117, %v115
    %vm122 = vcmask 130048
    %v124 = vsel %vm122, %v49, 0
    %126 = vmatprep.subr.bf16.mxu0 %v119
    %127 = vmatpush1.bf16.msra.mxu0 %v118
    %128 = vmatprep.subr.bf16.mxu0 0
    %129 = vmatpush1.bf16.msra.mxu0 0
    %130 = vmatprep.subr.bf16.mxu0 0
    %131 = vmatpush1.bf16.msra.mxu0 0
    %132 = vmatprep.subr.bf16.mxu0 0
    %133 = vmatpush1.bf16.msra.mxu0 0
    %134 = vmatprep.subr.bf16.mxu0 0
    %135 = vmatpush1.bf16.msra.mxu0 0
    %136 = vmatprep.subr.bf16.mxu0 0
    %137 = vmatpush1.bf16.msra.mxu0 0
    %138 = vmatprep.subr.bf16.mxu0 0
    %139 = vmatpush1.bf16.msra.mxu0 0
    %140 = vmatprep.subr.bf16.mxu0 0
    %141 = vmatpush1.bf16.msra.mxu0 0
    %142 = vmatprep.subr.bf16.mxu0 0
    %143 = vmatpush1.bf16.msra.mxu0 0
    %144 = vmatprep.subr.bf16.mxu0 0
    %145 = vmatpush1.bf16.msra.mxu0 0
    %146 = vmatprep.subr.bf16.mxu0 0
    %147 = vmatpush1.bf16.msra.mxu0 0
    %148 = vmatprep.subr.bf16.mxu0 0
    %149 = vmatpush1.bf16.msra.mxu0 0
    %150 = vmatprep.subr.bf16.mxu0 0
    %151 = vmatpush1.bf16.msra.mxu0 0
    %152 = vmatprep.subr.bf16.mxu0 0
    %153 = vmatpush1.bf16.msra.mxu0 0
    %154 = vmatprep.subr.bf16.mxu0 0
    %155 = vmatpush1.bf16.msra.mxu0 0
    %156 = vmatprep.subr.bf16.mxu0 0
    %157 = vmatpush1.bf16.msra.mxu0 0
    %158 = vmatprep.mubr.bf16.mxu0 0
    %159 = vmatmul.mubr.bf16.gmra.mrb[0].mxu0 %v124
    %v160 = vpop.f32.mrb[0].mxu0
    %v161 = vadd.f32 %v106, %v160
    %v162 = vpop.f32.mrb[0].mxu0
    %v163 = vadd.f32 %v108, %v162
    %v164 = vpop.f32.mrb[0].mxu0
    %v165 = vpop.f32.mrb[0].mxu0
    %166 = vdwg.mxu0
    %v167 = vld [vmem:[%s4] sm:$0x3]
    %v169 = vlaneseq
    %v170 = vshrl.u32 %v169, 7
    %v171 = vsub.s32 0, %v170
    %v172 = vrot.slane %v167, %v171
    %v173 = vlaneseq
    %v174 = vshrl.u32 %v173, 7
    %v175 = vsub.s32 1, %v174
    %v176 = vrot.slane %v167, %v175
    %v179 = vadd.f32 %v161, %v172
    %v180 = vadd.f32 %v163, %v176
    %v181 = vmax.f32 %v179, 0.0
    %v182 = vmax.f32 %v180, 0.0
    %v183 = vpack.c.bf16 %v181, %v181
    %v184 = vpack.c.bf16 %v182, %v182
    %v185 = vld [vmem:[#allocation2] sm:$0xff]
    %v186 = vld [vmem:[#allocation2 + $0x8] sm:$0xff]
    %v187 = vld [vmem:[#allocation2 + $0x10] sm:$0xff]
    %v188 = vld [vmem:[#allocation2 + $0x18] sm:$0xff]
    %v189 = vld [vmem:[#allocation2 + $0x20] sm:$0xff]
    %v190 = vld [vmem:[#allocation2 + $0x28] sm:$0xff]
    %v191 = vld [vmem:[#allocation2 + $0x30] sm:$0xff]
    %v192 = vld [vmem:[#allocation2 + $0x38] sm:$0xff]
    %v193 = vld [vmem:[#allocation2 + $0x40] sm:$0xff]
    %v194 = vld [vmem:[#allocation2 + $0x48] sm:$0xff]
    %v195 = vld [vmem:[#allocation2 + $0x50] sm:$0xff]
    %v196 = vld [vmem:[#allocation2 + $0x58] sm:$0xff]
    %v197 = vld [vmem:[#allocation2 + $0x60] sm:$0xff]
    %v198 = vld [vmem:[#allocation2 + $0x68] sm:$0xff]
    %v199 = vld [vmem:[#allocation2 + $0x70] sm:$0xff]
    %v200 = vld [vmem:[#allocation2 + $0x78] sm:$0xff]
    %v201 = vld [vmem:[#allocation2 + $0x80] sm:$0xff]
    %v202 = vld [vmem:[#allocation2 + $0x88] sm:$0xff]
    %v203 = vld [vmem:[#allocation2 + $0x90] sm:$0xff]
    %v204 = vld [vmem:[#allocation2 + $0x98] sm:$0xff]
    %v205 = vld [vmem:[#allocation2 + $0xa0] sm:$0xff]
    %v206 = vld [vmem:[#allocation2 + $0xa8] sm:$0xff]
    %v207 = vld [vmem:[#allocation2 + $0xb0] sm:$0xff]
    %v208 = vld [vmem:[#allocation2 + $0xb8] sm:$0xff]
    %v209 = vld [vmem:[#allocation2 + $0xc0] sm:$0xff]
    %v210 = vld [vmem:[#allocation2 + $0xc8] sm:$0xff]
    %v211 = vld [vmem:[#allocation2 + $0xd0] sm:$0xff]
    %v212 = vld [vmem:[#allocation2 + $0xd8] sm:$0xff]
    %v213 = vld [vmem:[#allocation2 + $0xe0] sm:$0xff]
    %v214 = vld [vmem:[#allocation2 + $0xe8] sm:$0xff]
    %v215 = vld [vmem:[#allocation2 + $0xf0] sm:$0xff]
    %v216 = vld [vmem:[#allocation2 + $0xf8] sm:$0xff]
    %v217 = vld [vmem:[%s6] sm:$0x3]
    %v219 = vlaneseq
    %v220 = vshrl.u32 %v219, 7
    %v221 = vsub.s32 0, %v220
    %v222 = vrot.slane %v217, %v221
    %v223 = vlaneseq
    %v224 = vshrl.u32 %v223, 7
    %v225 = vsub.s32 1, %v224
    %v226 = vrot.slane %v217, %v225
    %v261 = vunpack.c.l.b16 %v185
    %v262 = vunpack.c.h.b16 %v185
    %v263 = vunpack.c.l.b16 %v186
    %v264 = vunpack.c.h.b16 %v186
    %v265 = vunpack.c.l.b16 %v187
    %v266 = vunpack.c.h.b16 %v187
    %v267 = vunpack.c.l.b16 %v188
    %v268 = vunpack.c.h.b16 %v188
    %v269 = vunpack.c.l.b16 %v189
    %v270 = vunpack.c.h.b16 %v189
    %v271 = vunpack.c.l.b16 %v190
    %v272 = vunpack.c.h.b16 %v190
    %v273 = vunpack.c.l.b16 %v191
    %v274 = vunpack.c.h.b16 %v191
    %v275 = vunpack.c.l.b16 %v192
    %v276 = vunpack.c.h.b16 %v192
    %v277 = vunpack.c.l.b16 %v193
    %v278 = vunpack.c.h.b16 %v193
    %v279 = vunpack.c.l.b16 %v194
    %v280 = vunpack.c.h.b16 %v194
    %v281 = vunpack.c.l.b16 %v195
    %v282 = vunpack.c.h.b16 %v195
    %v283 = vunpack.c.l.b16 %v196
    %v284 = vunpack.c.h.b16 %v196
    %v285 = vunpack.c.l.b16 %v197
    %v286 = vunpack.c.h.b16 %v197
    %v287 = vunpack.c.l.b16 %v198
    %v288 = vunpack.c.h.b16 %v198
    %v289 = vunpack.c.l.b16 %v199
    %v290 = vunpack.c.h.b16 %v199
    %v291 = vunpack.c.l.b16 %v200
    %v292 = vunpack.c.h.b16 %v200
    %v293 = vunpack.c.l.b16 %v201
    %v294 = vunpack.c.h.b16 %v201
    %v295 = vunpack.c.l.b16 %v202
    %v296 = vunpack.c.h.b16 %v202
    %v297 = vunpack.c.l.b16 %v203
    %v298 = vunpack.c.h.b16 %v203
    %v299 = vunpack.c.l.b16 %v204
    %v300 = vunpack.c.h.b16 %v204
    %v301 = vunpack.c.l.b16 %v205
    %v302 = vunpack.c.h.b16 %v205
    %v303 = vunpack.c.l.b16 %v206
    %v304 = vunpack.c.h.b16 %v206
    %v305 = vunpack.c.l.b16 %v207
    %v306 = vunpack.c.h.b16 %v207
    %v307 = vunpack.c.l.b16 %v208
    %v308 = vunpack.c.h.b16 %v208
    %v309 = vunpack.c.l.b16 %v209
    %v310 = vunpack.c.h.b16 %v209
    %v311 = vunpack.c.l.b16 %v210
    %v312 = vunpack.c.h.b16 %v210
    %v313 = vunpack.c.l.b16 %v211
    %v314 = vunpack.c.h.b16 %v211
    %v315 = vunpack.c.l.b16 %v212
    %v316 = vunpack.c.h.b16 %v212
    %v317 = vunpack.c.l.b16 %v213
    %v318 = vunpack.c.h.b16 %v213
    %v319 = vunpack.c.l.b16 %v214
    %v320 = vunpack.c.h.b16 %v214
    %v321 = vunpack.c.l.b16 %v215
    %v322 = vunpack.c.h.b16 %v215
    %v323 = vunpack.c.l.b16 %v216
    %v324 = vunpack.c.h.b16 %v216
    %v325 = vpack.c.b16 %v263, %v261
    %v326 = vpack.c.b16 %v264, %v262
    %v327 = vpack.c.b16 %v267, %v265
    %v328 = vpack.c.b16 %v268, %v266
    %v329 = vpack.c.b16 %v271, %v269
    %v330 = vpack.c.b16 %v272, %v270
    %v331 = vpack.c.b16 %v275, %v273
    %v332 = vpack.c.b16 %v276, %v274
    %v333 = vpack.c.b16 %v279, %v277
    %v334 = vpack.c.b16 %v280, %v278
    %v335 = vpack.c.b16 %v283, %v281
    %v336 = vpack.c.b16 %v284, %v282
    %v337 = vpack.c.b16 %v287, %v285
    %v338 = vpack.c.b16 %v288, %v286
    %v339 = vpack.c.b16 %v291, %v289
    %v340 = vpack.c.b16 %v292, %v290
    %v341 = vpack.c.b16 %v295, %v293
    %v342 = vpack.c.b16 %v296, %v294
    %v343 = vpack.c.b16 %v299, %v297
    %v344 = vpack.c.b16 %v300, %v298
    %v345 = vpack.c.b16 %v303, %v301
    %v346 = vpack.c.b16 %v304, %v302
    %v347 = vpack.c.b16 %v307, %v305
    %v348 = vpack.c.b16 %v308, %v306
    %v349 = vpack.c.b16 %v311, %v309
    %v350 = vpack.c.b16 %v312, %v310
    %v351 = vpack.c.b16 %v315, %v313
    %v352 = vpack.c.b16 %v316, %v314
    %v353 = vpack.c.b16 %v319, %v317
    %v354 = vpack.c.b16 %v320, %v318
    %v355 = vpack.c.b16 %v323, %v321
    %v356 = vpack.c.b16 %v324, %v322
    %389 = vmatprep.subr.bf16.mxu0 %v326
    %390 = vmatpush1.bf16.msra.mxu0 %v325
    %391 = vmatprep.subr.bf16.mxu0 %v328
    %392 = vmatpush1.bf16.msra.mxu0 %v327
    %393 = vmatprep.subr.bf16.mxu0 %v330
    %394 = vmatpush1.bf16.msra.mxu0 %v329
    %395 = vmatprep.subr.bf16.mxu0 %v332
    %396 = vmatpush1.bf16.msra.mxu0 %v331
    %397 = vmatprep.subr.bf16.mxu0 %v334
    %398 = vmatpush1.bf16.msra.mxu0 %v333
    %399 = vmatprep.subr.bf16.mxu0 %v336
    %400 = vmatpush1.bf16.msra.mxu0 %v335
    %401 = vmatprep.subr.bf16.mxu0 %v338
    %402 = vmatpush1.bf16.msra.mxu0 %v337
    %403 = vmatprep.subr.bf16.mxu0 %v340
    %404 = vmatpush1.bf16.msra.mxu0 %v339
    %405 = vmatprep.subr.bf16.mxu0 %v342
    %406 = vmatpush1.bf16.msra.mxu0 %v341
    %407 = vmatprep.subr.bf16.mxu0 %v344
    %408 = vmatpush1.bf16.msra.mxu0 %v343
    %409 = vmatprep.subr.bf16.mxu0 %v346
    %410 = vmatpush1.bf16.msra.mxu0 %v345
    %411 = vmatprep.subr.bf16.mxu0 %v348
    %412 = vmatpush1.bf16.msra.mxu0 %v347
    %413 = vmatprep.subr.bf16.mxu0 %v350
    %414 = vmatpush1.bf16.msra.mxu0 %v349
    %415 = vmatprep.subr.bf16.mxu0 %v352
    %416 = vmatpush1.bf16.msra.mxu0 %v351
    %417 = vmatprep.subr.bf16.mxu0 %v354
    %418 = vmatpush1.bf16.msra.mxu0 %v353
    %419 = vmatprep.subr.bf16.mxu0 %v356
    %420 = vmatpush1.bf16.msra.mxu0 %v355
    %421 = vmatprep.mubr.bf16.mxu0 %v184
    %422 = vmatmul.mubr.bf16.gmra.mrb[0].mxu0 %v183
    %v423 = vpop.f32.mrb[0].mxu0
    %v424 = vadd.f32 %v222, %v423
    %v425 = vpop.f32.mrb[0].mxu0
    %v426 = vadd.f32 %v226, %v425
    %v427 = vpop.f32.mrb[0].mxu0
    %v428 = vpop.f32.mrb[0].mxu0
    %429 = vdwg.mxu0
    %v430 = vmax.f32 %v424, 0.0
    %v431 = vmax.f32 %v426, 0.0
    %v432 = vpack.c.bf16 %v430, %v430
    %v433 = vpack.c.bf16 %v431, %v431
    %v434 = vld [vmem:[%s7] sm:$0xf]
    %v435 = vld [vmem:[%s7 + $0x4] sm:$0xf]
    %v436 = vld [vmem:[%s7 + $0x8] sm:$0xf]
    %v437 = vld [vmem:[%s7 + $0xc] sm:$0xf]
    %v438 = vld [vmem:[%s7 + $0x10] sm:$0xf]
    %v439 = vld [vmem:[%s7 + $0x14] sm:$0xf]
    %v440 = vld [vmem:[%s7 + $0x18] sm:$0xf]
    %v441 = vld [vmem:[%s7 + $0x1c] sm:$0xf]
    %v442 = vld [vmem:[%s7 + $0x20] sm:$0xf]
    %v443 = vld [vmem:[%s7 + $0x24] sm:$0xf]
    %v444 = vld [vmem:[%s7 + $0x28] sm:$0xf]
    %v445 = vld [vmem:[%s7 + $0x2c] sm:$0xf]
    %v446 = vld [vmem:[%s7 + $0x30] sm:$0xf]
    %v447 = vld [vmem:[%s7 + $0x34] sm:$0xf]
    %v448 = vld [vmem:[%s7 + $0x38] sm:$0xf]
    %v449 = vld [vmem:[%s7 + $0x3c] sm:$0xf]
    %v450 = vld [vmem:[%s7 + $0x40] sm:$0xf]
    %v451 = vld [vmem:[%s7 + $0x44] sm:$0xf]
    %v452 = vld [vmem:[%s7 + $0x48] sm:$0xf]
    %v453 = vld [vmem:[%s7 + $0x4c] sm:$0xf]
    %v454 = vld [vmem:[%s7 + $0x50] sm:$0xf]
    %v455 = vld [vmem:[%s7 + $0x54] sm:$0xf]
    %v456 = vld [vmem:[%s7 + $0x58] sm:$0xf]
    %v457 = vld [vmem:[%s7 + $0x5c] sm:$0xf]
    %v458 = vld [vmem:[%s7 + $0x60] sm:$0xf]
    %v459 = vld [vmem:[%s7 + $0x64] sm:$0xf]
    %v460 = vld [vmem:[%s7 + $0x68] sm:$0xf]
    %v461 = vld [vmem:[%s7 + $0x6c] sm:$0xf]
    %v462 = vld [vmem:[%s7 + $0x70] sm:$0xf]
    %v463 = vld [vmem:[%s7 + $0x74] sm:$0xf]
    %v464 = vld [vmem:[%s7 + $0x78] sm:$0xf]
    %v465 = vld [vmem:[%s7 + $0x7c] sm:$0xf]
    %v466 = vld [vmem:[%s8] sm:$0x1]
    %v468 = vlaneseq
    %v469 = vshrl.u32 %v468, 7
    %v470 = vsub.s32 0, %v469
    %v471 = vrot.slane %v466, %v470
    %v505 = vunpack.c.l.b16 %v434
    %v506 = vunpack.c.l.b16 %v435
    %v507 = vunpack.c.l.b16 %v436
    %v508 = vunpack.c.l.b16 %v437
    %v509 = vunpack.c.l.b16 %v438
    %v510 = vunpack.c.l.b16 %v439
    %v511 = vunpack.c.l.b16 %v440
    %v512 = vunpack.c.l.b16 %v441
    %v513 = vunpack.c.l.b16 %v442
    %v514 = vunpack.c.l.b16 %v443
    %v515 = vunpack.c.l.b16 %v444
    %v516 = vunpack.c.l.b16 %v445
    %v517 = vunpack.c.l.b16 %v446
    %v518 = vunpack.c.l.b16 %v447
    %v519 = vunpack.c.l.b16 %v448
    %v520 = vunpack.c.l.b16 %v449
    %v521 = vunpack.c.l.b16 %v450
    %v522 = vunpack.c.l.b16 %v451
    %v523 = vunpack.c.l.b16 %v452
    %v524 = vunpack.c.l.b16 %v453
    %v525 = vunpack.c.l.b16 %v454
    %v526 = vunpack.c.l.b16 %v455
    %v527 = vunpack.c.l.b16 %v456
    %v528 = vunpack.c.l.b16 %v457
    %v529 = vunpack.c.l.b16 %v458
    %v530 = vunpack.c.l.b16 %v459
    %v531 = vunpack.c.l.b16 %v460
    %v532 = vunpack.c.l.b16 %v461
    %v533 = vunpack.c.l.b16 %v462
    %v534 = vunpack.c.l.b16 %v463
    %v535 = vunpack.c.l.b16 %v464
    %v536 = vunpack.c.l.b16 %v465
    %v537 = vpack.c.b16 %v506, %v505
    %v538 = vpack.c.b16 %v508, %v507
    %v539 = vpack.c.b16 %v510, %v509
    %v540 = vpack.c.b16 %v512, %v511
    %v541 = vpack.c.b16 %v514, %v513
    %v542 = vpack.c.b16 %v516, %v515
    %v543 = vpack.c.b16 %v518, %v517
    %v544 = vpack.c.b16 %v520, %v519
    %v545 = vpack.c.b16 %v522, %v521
    %v546 = vpack.c.b16 %v524, %v523
    %v547 = vpack.c.b16 %v526, %v525
    %v548 = vpack.c.b16 %v528, %v527
    %v549 = vpack.c.b16 %v530, %v529
    %v550 = vpack.c.b16 %v532, %v531
    %v551 = vpack.c.b16 %v534, %v533
    %v552 = vpack.c.b16 %v536, %v535
    %569 = vmatprep.subr.bf16.mxu0 0
    %570 = vmatpush1.bf16.msra.mxu0 %v537
    %571 = vmatprep.subr.bf16.mxu0 0
    %572 = vmatpush1.bf16.msra.mxu0 %v538
    %573 = vmatprep.subr.bf16.mxu0 0
    %574 = vmatpush1.bf16.msra.mxu0 %v539
    %575 = vmatprep.subr.bf16.mxu0 0
    %576 = vmatpush1.bf16.msra.mxu0 %v540
    %577 = vmatprep.subr.bf16.mxu0 0
    %578 = vmatpush1.bf16.msra.mxu0 %v541
    %579 = vmatprep.subr.bf16.mxu0 0
    %580 = vmatpush1.bf16.msra.mxu0 %v542
    %581 = vmatprep.subr.bf16.mxu0 0
    %582 = vmatpush1.bf16.msra.mxu0 %v543
    %583 = vmatprep.subr.bf16.mxu0 0
    %584 = vmatpush1.bf16.msra.mxu0 %v544
    %585 = vmatprep.subr.bf16.mxu0 0
    %586 = vmatpush1.bf16.msra.mxu0 %v545
    %587 = vmatprep.subr.bf16.mxu0 0
    %588 = vmatpush1.bf16.msra.mxu0 %v546
    %589 = vmatprep.subr.bf16.mxu0 0
    %590 = vmatpush1.bf16.msra.mxu0 %v547
    %591 = vmatprep.subr.bf16.mxu0 0
    %592 = vmatpush1.bf16.msra.mxu0 %v548
    %593 = vmatprep.subr.bf16.mxu0 0
    %594 = vmatpush1.bf16.msra.mxu0 %v549
    %595 = vmatprep.subr.bf16.mxu0 0
    %596 = vmatpush1.bf16.msra.mxu0 %v550
    %597 = vmatprep.subr.bf16.mxu0 0
    %598 = vmatpush1.bf16.msra.mxu0 %v551
    %599 = vmatprep.subr.bf16.mxu0 0
    %600 = vmatpush1.bf16.msra.mxu0 %v552
    %601 = vmatprep.mubr.bf16.mxu0 %v433
    %602 = vmatmul.mubr.bf16.gmra.mrb[0].mxu0 %v432
    %v603 = vpop.f32.mrb[0].mxu0
    %v604 = vadd.f32 %v471, %v603
    %v605 = vpop.f32.mrb[0].mxu0
    %v606 = vpop.f32.mrb[0].mxu0
    %v607 = vpop.f32.mrb[0].mxu0
    %608 = vdwg.mxu0
    %609 = vst.msk [vmem:[#allocation5] sm:$0xff] %vm60, %v604
    // Predicated region
    $region42: #{tpu_custom_call.1} parent=1 // pred_check
      _
    $region43: #{tpu_custom_call.1} parent=1 // pred_check_branch
      %611 = sbr.rel (0) target = $region45
    $region44: #{tpu_custom_call.1} parent=1 // pred_region
      %s613 = ssub.s32 128, 64
      %614 = vsyncadd [#allocation4], %s613
      %s615 = sshll.u32 [#allocation5], 4
      %s616 = int_to_ptr.vmem [resolvable:$true] %s615
      %621 = dma.vmem_to_hbm [thread:$0]  %s616, 64, %s9, [#allocation4], 64, 64, 4
    $region45: #{tpu_custom_call.1} parent=1 // pred_fallthru
      _
    // Predicated region
    $region46: #{tpu_custom_call.1} parent=1 // pred_check
      _
    $region47: #{tpu_custom_call.1} parent=1 // pred_check_branch
      %623 = sbr.rel (0) target = $region49
    $region48: #{tpu_custom_call.1} parent=1 // pred_region
      %624 = dma.done [#allocation4], 128
    $region49: #{tpu_custom_call.1} parent=1 // pred_fallthru
      _
    %625 = vsyncpa [#allocation3], 1
    %626 = vsyncpa [#allocation4], 1

</llo_original>
